<compile_context>
chip_gen: v7x
topology: tpu7x:2x2x1
jax: 0.10.0
libtpu: 0.0.40
codegen_flags: <defaults>
</compile_context>

<pallas_src>
import functools

import jax
import jax.numpy as jnp
from jax.experimental import pallas as pl
from jax.experimental.pallas import tpu as pltpu

_EPS = 1e-5


def _round_up(x, m):
    return (x + m - 1) // m * m


def _cdiv(a, b):
    return -(-a // b)


def _vmem_budget_bytes():
    """Generation-aware VMEM budget: 3/4 of physical capacity, capped at 96 MiB."""
    cap = 64 * 1024 * 1024  # conservative default (v7x physical VMEM)
    try:
        info = pltpu.get_tpu_info()
        cap = int(getattr(info, "vmem_capacity_bytes", cap))
    except Exception:
        pass
    return min((cap * 3) // 4, 96 * 1024 * 1024)


# ---------------------------------------------------------------------------
# Fast path: whole (N, tc, HW) channel-tile slab resident in VMEM.
# x is read from HBM exactly once; variance is computed centered.
# ---------------------------------------------------------------------------
def _bn2d_fast_kernel(x_ref, gamma_ref, beta_ref, o_ref, *, inv_count, eps):
    x = x_ref[...].astype(jnp.float32)                         # (N, tc, HW)
    s = jnp.sum(jnp.sum(x, axis=-1, keepdims=True), axis=0, keepdims=True)
    mean = s * inv_count                                       # (1, tc, 1)
    xc = x - mean
    v = jnp.sum(jnp.sum(xc * xc, axis=-1, keepdims=True), axis=0, keepdims=True)
    var = v * inv_count
    inv_std = jax.lax.rsqrt(var + eps)
    scale = gamma_ref[...].astype(jnp.float32)[None] * inv_std  # (1, tc, 1)
    shift = beta_ref[...].astype(jnp.float32)[None]
    o_ref[...] = (xc * scale + shift).astype(o_ref.dtype)


# ---------------------------------------------------------------------------
# Streaming path: two-phase (stats then normalize) over grid
# (channel_tiles, phase, N, hw_tiles).  Per-channel accumulators live in
# persistent VMEM scratch; the output BlockSpec is pinned during phase 0 so
# no writeback traffic happens during the stats pass.
# ---------------------------------------------------------------------------
def _bn2d_stream_kernel(x_ref, gamma_ref, beta_ref, o_ref,
                        sum_ref, sumsq_ref, scale_ref, shift_ref,
                        *, inv_count, eps, hw_total, block_hw, needs_hw_mask):
    p = pl.program_id(1)    # 0 = stats pass, 1 = normalize pass
    n = pl.program_id(2)
    hw = pl.program_id(3)
    last_n = pl.num_programs(2) - 1
    last_hw = pl.num_programs(3) - 1

    @pl.when(p == 0)
    def _stats_phase():
        @pl.when(jnp.logical_and(n == 0, hw == 0))
        def _init():
            sum_ref[...] = jnp.zeros_like(sum_ref)
            sumsq_ref[...] = jnp.zeros_like(sumsq_ref)

        x = x_ref[0].astype(jnp.float32)                        # (tc, tHW)
        if needs_hw_mask:
            # Mask out-of-range HW columns of the (possibly partial) last
            # tile; for full tiles the predicate is all-true.
            col = jax.lax.broadcasted_iota(jnp.int32, x.shape, 1)
            x = jnp.where(col < (hw_total - hw * block_hw), x, 0.0)

        # NOTE: Mosaic folds the lane-group adds onto the VPU before the final
        # cross-lane reduce, so no explicit XLU-offload is done here.
        sum_ref[...] = sum_ref[...] + jnp.sum(x, axis=-1, keepdims=True)
        sumsq_ref[...] = sumsq_ref[...] + jnp.sum(x * x, axis=-1, keepdims=True)

        @pl.when(jnp.logical_and(n == last_n, hw == last_hw))
        def _finalize():
            # E[x^2] - mean^2 in f32 (mildly cancellation-prone for very
            # large |mean|/std; the resident fast path uses centered variance).
            mean = sum_ref[...] * inv_count
            var = jnp.maximum(sumsq_ref[...] * inv_count - mean * mean, 0.0)
            inv_std = jax.lax.rsqrt(var + eps)
            scale = gamma_ref[...].astype(jnp.float32) * inv_std
            scale_ref[...] = scale
            shift_ref[...] = beta_ref[...].astype(jnp.float32) - mean * scale

    @pl.when(p == 1)
    def _normalize_phase():
        x = x_ref[0].astype(jnp.float32)
        o_ref[0] = (x * scale_ref[...] + shift_ref[...]).astype(o_ref.dtype)


def switch_batchnorm2d(x, gamma, beta, eps=_EPS, *,
                       force_streaming=False, block_c=None, block_hw=None):
    """x: NCHW float array. gamma/beta: (C,) affine params."""
    N, C, H, W = x.shape
    HW = H * W
    dtype = x.dtype
    itemsize = jnp.dtype(dtype).itemsize
    sub = max(8, 32 // itemsize)          # sublane multiple: 8 f32, 16 bf16

    x3 = x.reshape(N, C, HW)              # free view; no HBM padding copies
    g2 = gamma.astype(jnp.float32).reshape(C, 1)
    b2 = beta.astype(jnp.float32).reshape(C, 1)

    inv_count = 1.0 / float(N * HW)       # true per-channel element count
    budget = _vmem_budget_bytes()

    # ----------------- fast (single-HBM-read) path ------------------------
    # Per channel of slab: 2x double-buffered input + 2x output (input dtype)
    # plus ~3 f32-sized elementwise temporaries inside the kernel body.
    per_ch_bytes = N * HW * (4 * itemsize + 3 * 4)
    min_tc = C if C <= sub else sub
    fast_ok = (not force_streaming and block_c is None and block_hw is None
               and per_ch_bytes * max(min_tc, 1) <= budget)

    if fast_ok:
        if C <= sub:
            tc = C
        else:
            max_tc = max(sub, budget // per_ch_bytes)
            tc = max(sub, (min(C, max_tc) // sub) * sub)
            if C >= 2 * sub:
                # Keep >= 2 channel tiles so both v7x TensorCores get work.
                tc = min(tc, _round_up(_cdiv(C, 2), sub))
        grid = (_cdiv(C, tc),)
        kernel = functools.partial(_bn2d_fast_kernel,
                                   inv_count=inv_count, eps=eps)
        y3 = pl.pallas_call(
            kernel,
            out_shape=jax.ShapeDtypeStruct((N, C, HW), dtype),
            grid=grid,
            in_specs=[
                pl.BlockSpec((N, tc, HW), lambda c: (0, c, 0)),
                pl.BlockSpec((tc, 1), lambda c: (c, 0)),
                pl.BlockSpec((tc, 1), lambda c: (c, 0)),
            ],
            out_specs=pl.BlockSpec((N, tc, HW), lambda c: (0, c, 0)),
            compiler_params=pltpu.CompilerParams(
                dimension_semantics=("parallel",),
                vmem_limit_bytes=budget,
            ),
        )(x3, g2, b2)
        return y3.reshape(N, C, H, W)

    # ----------------- streaming (two-phase) path --------------------------
    # Channel tile: multiple of the sublane count (or full C), with >= 2 tiles
    # when C is large enough so the v7x megacore has parallel work.
    if block_c is not None:
        tc = block_c
    elif C > 256:
        tc = 256
    elif C >= 2 * sub:
        tc = _round_up(_cdiv(C, 2), sub)
    else:
        tc = C
    c_tiles = _cdiv(C, tc)

    # HW tile: ~2 MiB lane-dense blocks (multiple of 128) unless full HW fits.
    if block_hw is not None:
        tHW = block_hw
    else:
        cap = (((2 * 1024 * 1024 // itemsize) // tc) // 128) * 128
        cap = max(128, min(16384, cap))
        tHW = HW if HW <= cap else cap
    hw_tiles = _cdiv(HW, tHW)
    needs_hw_mask = (HW % tHW) != 0

    grid = (c_tiles, 2, N, hw_tiles)
    kernel = functools.partial(
        _bn2d_stream_kernel, inv_count=inv_count, eps=eps,
        hw_total=HW, block_hw=tHW, needs_hw_mask=needs_hw_mask)

    y3 = pl.pallas_call(
        kernel,
        out_shape=jax.ShapeDtypeStruct((N, C, HW), dtype),
        grid=grid,
        in_specs=[
            pl.BlockSpec((1, tc, tHW), lambda c, p, n, hw: (n, c, hw)),
            pl.BlockSpec((tc, 1), lambda c, p, n, hw: (c, 0)),
            pl.BlockSpec((tc, 1), lambda c, p, n, hw: (c, 0)),
        ],
        # Phase 0 pins the output block index to (0, c, 0) so no writeback
        # traffic occurs during the stats pass; phase 1 writes each block once.
        out_specs=pl.BlockSpec((1, tc, tHW),
                               lambda c, p, n, hw: (n * p, c, hw * p)),
        scratch_shapes=[
            pltpu.VMEM((tc, 1), jnp.float32),   # sum
            pltpu.VMEM((tc, 1), jnp.float32),   # sum of squares
            pltpu.VMEM((tc, 1), jnp.float32),   # scale = gamma * inv_std
            pltpu.VMEM((tc, 1), jnp.float32),   # shift = beta - mean * scale
        ],
        compiler_params=pltpu.CompilerParams(
            dimension_semantics=("parallel", "arbitrary", "arbitrary", "arbitrary"),
            vmem_limit_bytes=budget,
        ),
    )(x3, g2, b2)
    return y3.reshape(N, C, H, W)


def _reference_bn2d(x, gamma, beta, eps=_EPS):
    # Plain-JAX reference of PyTorch training-mode BatchNorm2d.
    mean = jnp.mean(x, axis=(0, 2, 3), keepdims=True)
    var = jnp.mean((x - mean) ** 2, axis=(0, 2, 3), keepdims=True)
    xhat = (x - mean) / jnp.sqrt(var + eps)
    return xhat * gamma.reshape(1, -1, 1, 1) + beta.reshape(1, -1, 1, 1)


if __name__ == "__main__":
    key = jax.random.PRNGKey(0)
    kx, kg, kb, kx2, kx3 = jax.random.split(key, 5)

    # Case 1: module-spec shapes (num_features = C); exercises the fast
    # single-HBM-read path.  w_bit in the module is bookkeeping only.
    N, C, H, W = 2, 4, 16, 16
    x = jax.random.normal(kx, (N, C, H, W), dtype=jnp.float32)
    gamma = jnp.ones((C,), jnp.float32) + 0.1 * jax.random.normal(kg, (C,), jnp.float32)
    beta = 0.1 * jax.random.normal(kb, (C,), jnp.float32)
    y = jax.block_until_ready(switch_batchnorm2d(x, gamma, beta))
    y_ref = _reference_bn2d(x, gamma, beta)
    assert y.shape == x.shape and y.dtype == x.dtype
    assert jnp.max(jnp.abs(y - y_ref)) < 1e-4, "mismatch vs reference (fast path)"

    # Case 2: odd channel / spatial sizes and a nonzero mean (no padding,
    # full-dim blocks, centered-variance fast path).
    x2 = jax.random.normal(kx2, (2, 3, 5, 7), dtype=jnp.float32) * 2.0 + 1.5
    g2 = jnp.linspace(0.5, 1.5, 3, dtype=jnp.float32)
    b2 = jnp.linspace(-0.2, 0.2, 3, dtype=jnp.float32)
    y2 = jax.block_until_ready(switch_batchnorm2d(x2, g2, b2))
    assert jnp.max(jnp.abs(y2 - _reference_bn2d(x2, g2, b2))) < 1e-4, \
        "mismatch vs reference (odd shapes)"

    # Case 3: force the two-phase streaming path with partial channel and
    # partial HW tiles so masked stats + bounded writeback are covered.
    x3 = jax.random.normal(kx3, (2, 12, 10, 16), dtype=jnp.float32) + 0.5
    g3 = jnp.linspace(0.8, 1.2, 12, dtype=jnp.float32)
    b3 = jnp.linspace(-0.3, 0.3, 12, dtype=jnp.float32)
    y3 = jax.block_until_ready(
        switch_batchnorm2d(x3, g3, b3, force_streaming=True,
                           block_c=8, block_hw=128))
    assert jnp.max(jnp.abs(y3 - _reference_bn2d(x3, g3, b3))) < 1e-4, \
        "mismatch vs reference (streaming, partial tiles)"

    # Case 4: streaming path with default tile selection.
    y4 = jax.block_until_ready(switch_batchnorm2d(x, gamma, beta,
                                                  force_streaming=True))
    assert jnp.max(jnp.abs(y4 - y_ref)) < 1e-4, \
        "mismatch vs reference (streaming, default tiles)"

    print("KERNEL_OK")
</pallas_src>

<mosaic_0001>
module attributes {stable_mosaic.version = 11 : i64} {
  func.func @_bn2d_fast_kernel(%arg0: i32, %arg1: memref<2x4x256xf32, #tpu.memory_space<vmem>>, %arg2: memref<4x1xf32, #tpu.memory_space<vmem>>, %arg3: memref<4x1xf32, #tpu.memory_space<vmem>>, %arg4: memref<2x4x256xf32, #tpu.memory_space<vmem>>) attributes {dimension_semantics = [#tpu.dimension_semantics<parallel>], iteration_bounds = array<i64: 1>, scalar_prefetch = 0 : i64, scratch_operands = 0 : i64, tpu.core_type = #tpu.core_type<tc>, window_params = [{transform_indices = @transform_0, window_bounds = array<i64: 2, 4, 256>}, {transform_indices = @transform_1, window_bounds = array<i64: 4, 1>}, {transform_indices = @transform_2, window_bounds = array<i64: 4, 1>}, {transform_indices = @transform_3, window_bounds = array<i64: 2, 4, 256>}]} {
    %c0 = arith.constant 0 : index
    %c0_0 = arith.constant 0 : index
    %c0_1 = arith.constant 0 : index
    %0 = vector.load %arg1[%c0, %c0_0, %c0_1] : memref<2x4x256xf32, #tpu.memory_space<vmem>>, vector<2x4x256xf32>
    %cst = arith.constant dense<0.000000e+00> : vector<2x4xf32>
    %1 = vector.multi_reduction <add>, %0, %cst [2] : vector<2x4x256xf32> to vector<2x4xf32>
    %2 = vector.shape_cast %1 : vector<2x4xf32> to vector<2x4x1xf32>
    %cst_2 = arith.constant dense<0.000000e+00> : vector<4x1xf32>
    %3 = vector.multi_reduction <add>, %2, %cst_2 [0] : vector<2x4x1xf32> to vector<4x1xf32>
    %4 = vector.shape_cast %3 : vector<4x1xf32> to vector<1x4x1xf32>
    %cst_3 = arith.constant 0.001953125 : f32
    %5 = vector.broadcast %cst_3 : f32 to vector<1x4x1xf32>
    %6 = arith.mulf %4, %5 : vector<1x4x1xf32>
    %7 = vector.broadcast %6 : vector<1x4x1xf32> to vector<2x4x256xf32>
    %8 = arith.subf %0, %7 : vector<2x4x256xf32>
    %9 = arith.mulf %8, %8 : vector<2x4x256xf32>
    %cst_4 = arith.constant dense<0.000000e+00> : vector<2x4xf32>
    %10 = vector.multi_reduction <add>, %9, %cst_4 [2] : vector<2x4x256xf32> to vector<2x4xf32>
    %11 = vector.shape_cast %10 : vector<2x4xf32> to vector<2x4x1xf32>
    %cst_5 = arith.constant dense<0.000000e+00> : vector<4x1xf32>
    %12 = vector.multi_reduction <add>, %11, %cst_5 [0] : vector<2x4x1xf32> to vector<4x1xf32>
    %13 = vector.shape_cast %12 : vector<4x1xf32> to vector<1x4x1xf32>
    %cst_6 = arith.constant 0.001953125 : f32
    %14 = vector.broadcast %cst_6 : f32 to vector<1x4x1xf32>
    %15 = arith.mulf %13, %14 : vector<1x4x1xf32>
    %cst_7 = arith.constant 9.99999974E-6 : f32
    %16 = vector.broadcast %cst_7 : f32 to vector<1x4x1xf32>
    %17 = arith.addf %15, %16 : vector<1x4x1xf32>
    %18 = math.rsqrt %17 : vector<1x4x1xf32>
    %c0_8 = arith.constant 0 : index
    %c0_9 = arith.constant 0 : index
    %19 = vector.load %arg2[%c0_8, %c0_9] : memref<4x1xf32, #tpu.memory_space<vmem>>, vector<4x1xf32>
    %20 = vector.shape_cast %19 : vector<4x1xf32> to vector<1x4x1xf32>
    %21 = arith.mulf %20, %18 : vector<1x4x1xf32>
    %c0_10 = arith.constant 0 : index
    %c0_11 = arith.constant 0 : index
    %22 = vector.load %arg3[%c0_10, %c0_11] : memref<4x1xf32, #tpu.memory_space<vmem>>, vector<4x1xf32>
    %23 = vector.shape_cast %22 : vector<4x1xf32> to vector<1x4x1xf32>
    %24 = vector.broadcast %21 : vector<1x4x1xf32> to vector<2x4x256xf32>
    %25 = arith.mulf %8, %24 : vector<2x4x256xf32>
    %26 = vector.broadcast %23 : vector<1x4x1xf32> to vector<2x4x256xf32>
    %27 = arith.addf %25, %26 : vector<2x4x256xf32>
    %c0_12 = arith.constant 0 : index
    %c0_13 = arith.constant 0 : index
    %c0_14 = arith.constant 0 : index
    %28 = vector.load %arg4[%c0_12, %c0_13, %c0_14] : memref<2x4x256xf32, #tpu.memory_space<vmem>>, vector<2x4x256xf32>
    tpu.vector_store %arg4[%c0_12, %c0_13, %c0_14], %27 {strides = array<i32>} : memref<2x4x256xf32, #tpu.memory_space<vmem>>, vector<2x4x256xf32>,
    return
  }
  func.func @transform_0(%arg0: i32) -> (i32, i32, i32) {
    %c0_i32 = arith.constant 0 : i32
    %c0_i32_0 = arith.constant 0 : i32
    %c0_i32_1 = arith.constant 0 : i32
    return %c0_i32, %arg0, %c0_i32_0 : i32, i32, i32
  }
  func.func @transform_1(%arg0: i32) -> (i32, i32) {
    %c0_i32 = arith.constant 0 : i32
    %c0_i32_0 = arith.constant 0 : i32
    return %arg0, %c0_i32 : i32, i32
  }
  func.func @transform_2(%arg0: i32) -> (i32, i32) {
    %c0_i32 = arith.constant 0 : i32
    %c0_i32_0 = arith.constant 0 : i32
    return %arg0, %c0_i32 : i32, i32
  }
  func.func @transform_3(%arg0: i32) -> (i32, i32, i32) {
    %c0_i32 = arith.constant 0 : i32
    %c0_i32_0 = arith.constant 0 : i32
    %c0_i32_1 = arith.constant 0 : i32
    return %c0_i32, %arg0, %c0_i32_0 : i32, i32, i32
  }
}

</mosaic_0001>

<llo_original>
// kernel: tpu_custom_call.1
$region0: #{tpu_custom_call.1}
  #allocation0 [shape = 'u32[]', space=smem, size = 0x4, offset = 0x4, fixed_abs, tag = 'smem constant byte address 0x4 - core index']
  #allocation1 [shape = 'u32[144,128]{1,0:T(1,128)}', space=vmem, size = 0x12000, scoped, tag = 'internal scratch']
  %s0 = inlined_call_operand.hbm [shape: f32[2,4,256], index: 0, kind: input, shape index: {}]
  %s1 = inlined_call_operand.vmem [shape: f32[4,1], index: 1, kind: input, shape index: {}]
  %s2 = inlined_call_operand.vmem [shape: f32[4,1], index: 2, kind: input, shape index: {}]
  %s3 = inlined_call_operand.hbm [shape: f32[2,4,256], index: 3, kind: output, shape index: {}]
  %s4 = sld [smem:[#allocation0]]
  $region26: #{tpu_custom_call.1} parent=0
    _
  %s6 = ssub.s32 1, %s4
  %s7 = scalar_select 0, %s6, %s4
  $region1: #{tpu_custom_call.1} parent=0
    #allocation2 [shape = 'u8[8192]{0}', space=vmem, size = 0x2000, scoped, tag = 'input window, operand 0, single buffered']
    #allocation3 [shape = 's32[1]{0}', space=sflag, size = 0x4, scoped, tag = 'scoped memory for tpu_custom_call.1']
    #allocation4 [shape = 's32[1]{0}', space=sflag, size = 0x4, scoped, tag = 'scoped memory for tpu_custom_call.1']
    #allocation5 [shape = 'u8[8192]{0}', space=vmem, size = 0x2000, scoped, tag = 'output window, operand 0, single buffered']
    %8 = vsyncpa [#allocation3], 0
    %9 = vsyncpa [#allocation4], 0
    // Predicated region
    $region2: #{tpu_custom_call.1} parent=1 // pred_check
      _
    $region3: #{tpu_custom_call.1} parent=1 // pred_check_branch
      %11 = sbr.rel (0) target = $region5
    $region4: #{tpu_custom_call.1} parent=1 // pred_region
      %s13 = ssub.s32 256, 256
      %14 = vsyncadd [#allocation3], %s13
      %s15 = sshll.u32 [#allocation2], 4
      %s16 = int_to_ptr.vmem [resolvable:$true] %s15
      %21 = dma.hbm_to_vmem [thread:$0]  %s0, 256, %s16, [#allocation3], 128, 128, 8
    $region5: #{tpu_custom_call.1} parent=1 // pred_fallthru
      _
    // Predicated region
    $region6: #{tpu_custom_call.1} parent=1 // pred_check
      _
    $region7: #{tpu_custom_call.1} parent=1 // pred_check_branch
      %23 = sbr.rel (0) target = $region9
    $region8: #{tpu_custom_call.1} parent=1 // pred_region
      _
    $region9: #{tpu_custom_call.1} parent=1 // pred_fallthru
      _
    // Predicated region
    $region10: #{tpu_custom_call.1} parent=1 // pred_check
      _
    $region11: #{tpu_custom_call.1} parent=1 // pred_check_branch
      %25 = sbr.rel (0) target = $region13
    $region12: #{tpu_custom_call.1} parent=1 // pred_region
      _
    $region13: #{tpu_custom_call.1} parent=1 // pred_fallthru
      _
    // Predicated region
    $region14: #{tpu_custom_call.1} parent=1 // pred_check
      _
    $region15: #{tpu_custom_call.1} parent=1 // pred_check_branch
      %27 = sbr.rel (0) target = $region17
    $region16: #{tpu_custom_call.1} parent=1 // pred_region
      %28 = dma.done [#allocation3], 256
    $region17: #{tpu_custom_call.1} parent=1 // pred_fallthru
      _
    %v29 = vld [vmem:[#allocation2] sm:$0xff]
    %v30 = vld [vmem:[#allocation2 + $0x8] sm:$0xff]
    %v33 = vcombine.high %v29, %v29
    %v34 = vcombine.high %v30, %v30
    %vm37 = vcmask 1043456
    %v38 = vsel %vm37, %v29, 0.0
    %v39 = vsel %vm37, %v33, 0.0
    %v40 = vadd.f32 %v38, %v39
    %41 = vadd.xlane.f32.xlu0 %v40
    %v42 = vpop.xlane.xlu0 %41
    %v43 = vsel %vm37, %v30, 0.0
    %v44 = vsel %vm37, %v34, 0.0
    %v45 = vadd.f32 %v43, %v44
    %46 = vadd.xlane.f32.xlu0 %v45
    %v47 = vpop.xlane.xlu0 %46
    %v48 = vsel %vm37, %v42, 0.0
    %v49 = vsel %vm37, %v47, 0.0
    %v50 = vadd.f32 %v48, %v49
    %v51 = vmul.f32 %v50, 0.001953125
    %v54 = vunpack.c.l.s4 839922192
    %v55 = vunpack.c.0.s8 %v54
    %v56 = vlaneseq
    %v57 = vshrl.u32 %v56, 7
    %v58 = vsub.s32 %v55, %v57
    %v59 = vrot.slane %v51, %v58
    %v61 = vsub.f32 %v29, %v59
    %v62 = vsub.f32 %v30, %v59
    %v63 = vmul.f32 %v61, %v61
    %v64 = vmul.f32 %v62, %v62
    %v67 = vcombine.high %v63, %v63
    %v68 = vcombine.high %v64, %v64
    %v71 = vsel %vm37, %v63, 0.0
    %v72 = vsel %vm37, %v67, 0.0
    %v73 = vadd.f32 %v71, %v72
    %74 = vadd.xlane.f32.xlu0 %v73
    %v75 = vpop.xlane.xlu0 %74
    %v76 = vsel %vm37, %v64, 0.0
    %v77 = vsel %vm37, %v68, 0.0
    %v78 = vadd.f32 %v76, %v77
    %79 = vadd.xlane.f32.xlu0 %v78
    %v80 = vpop.xlane.xlu0 %79
    %v81 = vsel %vm37, %v75, 0.0
    %v82 = vsel %vm37, %v80, 0.0
    %v83 = vadd.f32 %v81, %v82
    %v84 = vmul.f32 %v83, 0.001953125
    %v85 = vadd.f32 %v84, 1e-05
    %v86 = vrsqrt.pop %v85
    %v87 = vld [vmem:[%s1] sm:$0xf]
    %v88 = vmul.f32 %v87, %v86
    %v89 = vld [vmem:[%s2] sm:$0xf]
    %91 = vset.pattern.permute.xlu0 0
    %92 = vperm.xlu0 %91, %v88
    %v93 = vpop.permute.xlu0 %92
    %v95 = vunpack.c.l.s4 839922192
    %v96 = vunpack.c.0.s8 %v95
    %v97 = vlaneseq
    %v98 = vshrl.u32 %v97, 7
    %v99 = vsub.s32 %v96, %v98
    %v100 = vrot.slane %v93, %v99
    %v102 = vmul.f32 %v61, %v100
    %v103 = vmul.f32 %v62, %v100
    %105 = vset.pattern.permute.xlu0 0
    %106 = vperm.xlu0 %105, %v89
    %v107 = vpop.permute.xlu0 %106
    %v109 = vunpack.c.l.s4 839922192
    %v110 = vunpack.c.0.s8 %v109
    %v111 = vlaneseq
    %v112 = vshrl.u32 %v111, 7
    %v113 = vsub.s32 %v110, %v112
    %v114 = vrot.slane %v107, %v113
    %v116 = vadd.f32 %v102, %v114
    %v117 = vadd.f32 %v103, %v114
    %118 = vst [vmem:[#allocation5] sm:$0xff] %v116
    %119 = vst [vmem:[#allocation5 + $0x8] sm:$0xff] %v117
    // Predicated region
    $region18: #{tpu_custom_call.1} parent=1 // pred_check
      _
    $region19: #{tpu_custom_call.1} parent=1 // pred_check_branch
      %121 = sbr.rel (0) target = $region21
    $region20: #{tpu_custom_call.1} parent=1 // pred_region
      %s123 = ssub.s32 256, 256
      %124 = vsyncadd [#allocation4], %s123
      %s125 = sshll.u32 [#allocation5], 4
      %s126 = int_to_ptr.vmem [resolvable:$true] %s125
      %131 = dma.vmem_to_hbm [thread:$0]  %s126, 256, %s3, [#allocation4], 128, 128, 8
    $region21: #{tpu_custom_call.1} parent=1 // pred_fallthru
      _
    // Predicated region
    $region22: #{tpu_custom_call.1} parent=1 // pred_check
      _
    $region23: #{tpu_custom_call.1} parent=1 // pred_check_branch
      %133 = sbr.rel (0) target = $region25
    $region24: #{tpu_custom_call.1} parent=1 // pred_region
      %134 = dma.done [#allocation4], 256
    $region25: #{tpu_custom_call.1} parent=1 // pred_fallthru
      _
    %135 = vsyncpa [#allocation3], 1
    %136 = vsyncpa [#allocation4], 1

</llo_original>
